<compile_context>
chip_gen: v6e
topology: v6e:2x2x1
jax: 0.10.0
libtpu: 0.0.40
codegen_flags: <defaults>
</compile_context>

<pallas_src>
import functools
import math

import jax
import jax.numpy as jnp
from jax.experimental import pallas as pl
from jax.experimental.pallas import tpu as pltpu


def _round_up(x, m):
    return ((x + m - 1) // m) * m


# -----------------------------------------------------------------------------
# Tiling heuristics
# -----------------------------------------------------------------------------
def _choose_row_tile(M):
    # Largest row tile whose zero-padding overhead stays <= ~6% (padded rows
    # are real adjacency HBM bytes); small M falls back to 128, which also
    # maximizes grid_m (grid_m >= 2 keeps both v7x TensorCores busy).
    for cand in (512, 256):
        if _round_up(M, cand) - M <= M // 16:
            return cand
    return 128


def _choose_k_tile(K, force_tk=None):
    # Reduction tile chosen FIRST, K padded up to it.  Up to Kp=4096 a single
    # reduction step (no k-loop at all); above that the largest of
    # 4096/2048/1024 with <= ~6% padding overhead, else 512.
    Kp128 = _round_up(K, 128)
    if force_tk is not None:
        tk = force_tk
    elif Kp128 <= 4096:
        tk = Kp128
    else:
        tk = 512
        for cand in (4096, 2048, 1024):
            if _round_up(K, cand) - Kp128 <= Kp128 // 16:
                tk = cand
                break
    return tk, _round_up(Kp128, tk)


# -----------------------------------------------------------------------------
# Pallas kernel: out = LeakyReLU(row_scale * (adj_mask @ emb))
# -----------------------------------------------------------------------------
def _gcn_leaky_kernel(adj_ref, emb_ref, scale_ref, out_ref, *,
                      leaky, tk, num_k, resident):
    k = pl.program_id(1)

    a = adj_ref[...]
    if a.dtype != jnp.bfloat16:                 # int8 0/1 mask -> bf16 (VPU, free under DMA)
        a = a.astype(jnp.float32).astype(jnp.bfloat16)

    if resident and num_k > 1:
        start = pl.multiple_of(k * tk, tk)
        e = emb_ref[pl.ds(start, tk), :]        # slice the VMEM-resident emb
    else:
        e = emb_ref[...]

    part = jnp.dot(a, e, preferred_element_type=jnp.float32)

    def _finalize(acc):
        y = acc * scale_ref[...]                # exact per-row 1/deg scale
        return jnp.where(y >= 0.0, y, leaky * y)

    if num_k == 1:
        out_ref[...] = _finalize(part)
    else:
        @pl.when(k == 0)
        def _():
            out_ref[...] = part                 # f32 output block is the accumulator

        @pl.when(k != 0)
        def _():
            out_ref[...] += part

        @pl.when(k == num_k - 1)
        def _():
            out_ref[...] = _finalize(out_ref[...])


# -----------------------------------------------------------------------------
# Host-side wrappers
# -----------------------------------------------------------------------------
def prepare_adjacency(adj, *, force_tk=None):
    """Pad + pack a dense adjacency once; reused by every GCN layer.

    If every row's nonzeros share a single value (row-normalized adjacency),
    stores an int8 0/1 mask plus an exact per-row f32 scale (quarter the f32
    bytes, numerically exact).  Otherwise falls back to a bf16 copy with unit
    row scales.  Not jittable (concrete factorization check).
    """
    M, K = adj.shape
    tm = _choose_row_tile(M)
    tk, Kp = _choose_k_tile(K, force_tk)
    Mp = _round_up(M, tm)

    mask = (adj != 0.0)
    idx = jnp.argmax(jnp.abs(adj), axis=1)
    row_val = jnp.take_along_axis(adj, idx[:, None], axis=1)        # (M,1), signed
    factorizable = bool(jnp.all(adj == row_val * mask.astype(adj.dtype)))

    if factorizable:
        adj_p = jnp.pad(mask.astype(jnp.int8), ((0, Mp - M), (0, Kp - K)))
        scale = row_val.astype(jnp.float32)
    else:
        # TODO(synk): generic weighted adjacency keeps bf16 values (~0.4%/entry
        # quantization); could stay f32 in HBM and cast per tile instead.
        adj_p = jnp.pad(adj, ((0, Mp - M), (0, Kp - K))).astype(jnp.bfloat16)
        scale = jnp.ones((M, 1), jnp.float32)
    scale_p = jnp.pad(scale, ((0, Mp - M), (0, 0)), constant_values=1.0)

    return {"adj": adj_p, "scale": scale_p, "M": M, "K": K,
            "tm": tm, "tk": tk, "Mp": Mp, "Kp": Kp}


_EMB_RESIDENT_BUDGET = 16 * 1024 * 1024   # bytes for the (double-buffered) emb


def gcn_leaky(prep, emb, *, leaky, force_stream_emb=False):
    """LeakyReLU(adj @ emb) with a tiled Pallas MXU kernel.

    prep: output of prepare_adjacency; emb: (K, D) f32. Returns (M, D) f32.
    """
    adj_p, scale_p = prep["adj"], prep["scale"]
    M, K, tm, tk = prep["M"], prep["K"], prep["tm"], prep["tk"]
    Mp, Kp = prep["Mp"], prep["Kp"]
    K2, D = emb.shape
    assert K2 == K

    Dp = _round_up(D, 128)                    # lane-dense output
    emb_p = jnp.pad(emb, ((0, Kp - K), (0, Dp - D))).astype(jnp.bfloat16)

    grid_m = Mp // tm
    grid_k = Kp // tk

    # Keep emb VMEM-resident across all row tiles when it fits the budget:
    # it is then read from HBM once instead of grid_m times.
    resident = (not force_stream_emb) and (2 * Kp * Dp * 2 <= _EMB_RESIDENT_BUDGET)

    if resident:
        emb_spec = pl.BlockSpec((Kp, Dp), lambda i, k: (0, 0))
    else:
        emb_spec = pl.BlockSpec((tk, Dp), lambda i, k: (k, 0))

    adj_elt_bytes = adj_p.dtype.itemsize
    vmem_est = (2 * tm * tk * adj_elt_bytes                       # adj (2 bufs)
                + (2 * Kp * Dp * 2 if resident else 2 * tk * Dp * 2)
                + 2 * tm * Dp * 4                                 # out block
                + 2 * tm * 4)                                     # row scale
    # v5e's default scoped-VMEM limit is only 16 MiB; raise it explicitly but
    # stay well under v7x's 64 MiB physical VMEM.
    vmem_limit = min(max(int(vmem_est * 3 // 2) + (2 << 20), 32 << 20), 48 << 20)

    cost = pl.CostEstimate(
        flops=2 * Mp * Kp * Dp,
        transcendentals=0,
        bytes_accessed=(Mp * Kp * adj_elt_bytes
                        + (1 if resident else grid_m) * Kp * Dp * 2
                        + Mp * Dp * 4 + Mp * 4),
    )

    kernel = functools.partial(_gcn_leaky_kernel, leaky=leaky, tk=tk,
                               num_k=grid_k, resident=resident)

    out_p = pl.pallas_call(
        kernel,
        out_shape=jax.ShapeDtypeStruct((Mp, Dp), jnp.float32),
        grid_spec=pltpu.PrefetchScalarGridSpec(
            num_scalar_prefetch=0,
            grid=(grid_m, grid_k),
            in_specs=[
                pl.BlockSpec((tm, tk), lambda i, k: (i, k)),
                emb_spec,
                pl.BlockSpec((tm, 1), lambda i, k: (i, 0)),
            ],
            out_specs=pl.BlockSpec((tm, Dp), lambda i, k: (i, 0)),
        ),
        compiler_params=pltpu.CompilerParams(
            dimension_semantics=("parallel", "arbitrary"),
            vmem_limit_bytes=vmem_limit,
        ),
        cost_estimate=cost,
    )(adj_p, emb_p, scale_p)

    return out_p[:M, :D]


# -----------------------------------------------------------------------------
# SocialModel4 forward (keepRate == 1.0 path; edgeDropper is identity there)
# -----------------------------------------------------------------------------
def social_model4_forward(params, adj, tag_adj, *, keep_rate=1.0,
                          gnn_layer=2, leaky=0.5):
    # TODO(synk): SpAdjDropEdge (per-edge Bernoulli sampling of a sparse COO
    # adjacency) for keep_rate < 1.0 has no clean dense-Pallas equivalent;
    # only the keep_rate == 1.0 (identity) path is implemented.
    assert keep_rate == 1.0

    u = params["uEmbeds"]
    i = params["iEmbeds"]
    tg = params["tEmbeds"]
    n_user = u.shape[0]
    n_item = i.shape[0]

    embeds = jnp.concatenate([u, i], axis=0)          # (user+item, latdim)
    tagembeds = jnp.concatenate([i, tg], axis=0)      # (item+tag, latdim)

    # Pack / pad each adjacency once; reused by every GCN layer.
    adj_prep = prepare_adjacency(adj)
    tag_prep = prepare_adjacency(tag_adj)

    lats = [embeds]
    gnn_lats = []
    tag_lats = [tagembeds]

    for _ in range(gnn_layer):
        tem_embeds = gcn_leaky(adj_prep, lats[-1], leaky=leaky)
        tag_in = jnp.concatenate(
            [lats[-1][n_user:], tag_lats[-1][n_item:]], axis=0
        )
        tag_lat = gcn_leaky(tag_prep, tag_in, leaky=leaky)

        gnn_lats.append(tem_embeds)
        tag_lats.append(tag_lat)

        a = tem_embeds[:n_user]
        b = tem_embeds[n_user:] + tag_lat[:n_item]
        lats.append(jnp.concatenate([a, b], axis=0))

    out_embeds = lats[0]
    for l in lats[1:]:
        out_embeds = out_embeds + l
    return out_embeds, gnn_lats, tag_lats


# -----------------------------------------------------------------------------
# Reference, deterministic inputs, checks
# -----------------------------------------------------------------------------
def xavier_uniform(key, shape, dtype=jnp.float32):
    fan_in, fan_out = shape[0], shape[1]
    bound = math.sqrt(6.0 / (fan_in + fan_out))
    return jax.random.uniform(key, shape, dtype, minval=-bound, maxval=bound)


def _gcn_ref(adj, emb, leaky):
    y = adj @ emb
    return jnp.where(y >= 0.0, y, leaky * y)


def _reference_forward(params, adj, tag_adj, *, gnn_layer, leaky):
    u, i, tg = params["uEmbeds"], params["iEmbeds"], params["tEmbeds"]
    n_user, n_item = u.shape[0], i.shape[0]
    lats = [jnp.concatenate([u, i], axis=0)]
    tag_lats = [jnp.concatenate([i, tg], axis=0)]
    for _ in range(gnn_layer):
        tem = _gcn_ref(adj, lats[-1], leaky)
        tag_in = jnp.concatenate([lats[-1][n_user:], tag_lats[-1][n_item:]], axis=0)
        tag_lat = _gcn_ref(tag_adj, tag_in, leaky)
        tag_lats.append(tag_lat)
        a = tem[:n_user]
        b = tem[n_user:] + tag_lat[:n_item]
        lats.append(jnp.concatenate([a, b], axis=0))
    out = lats[0]
    for l in lats[1:]:
        out = out + l
    return out


def _make_inputs(key, n_user, n_item, n_tag, latdim):
    k_u, k_i, k_t, k_adj, k_tadj = jax.random.split(key, 5)
    params = {
        "uEmbeds": xavier_uniform(k_u, (n_user, latdim)),
        "iEmbeds": xavier_uniform(k_i, (n_item, latdim)),
        "tEmbeds": xavier_uniform(k_t, (n_tag, latdim)),
    }
    # Dense stand-ins for the (row-normalized) sparse adjacencies.
    n_ui = n_user + n_item
    n_it = n_item + n_tag
    adj_raw = (jax.random.uniform(k_adj, (n_ui, n_ui)) > 0.7).astype(jnp.float32)
    adj = adj_raw / jnp.maximum(adj_raw.sum(axis=1, keepdims=True), 1.0)
    tadj_raw = (jax.random.uniform(k_tadj, (n_it, n_it)) > 0.7).astype(jnp.float32)
    tag_adj = tadj_raw / jnp.maximum(tadj_raw.sum(axis=1, keepdims=True), 1.0)
    return params, adj, tag_adj


def _run_check(key, n_user, n_item, n_tag, latdim, gnn_layer=2, leaky=0.5):
    params, adj, tag_adj = _make_inputs(key, n_user, n_item, n_tag, latdim)
    embeds, gnn_lats, tag_lats = social_model4_forward(
        params, adj, tag_adj, keep_rate=1.0, gnn_layer=gnn_layer, leaky=leaky
    )
    embeds = jax.block_until_ready(embeds)
    ref = _reference_forward(params, adj, tag_adj, gnn_layer=gnn_layer, leaky=leaky)
    assert embeds.shape == (n_user + n_item, latdim)
    assert len(gnn_lats) == gnn_layer and len(tag_lats) == gnn_layer + 1
    # Adjacency path is exact (int8 mask + f32 scale); only emb is bf16 on MXU.
    max_err = float(jnp.max(jnp.abs(embeds - ref)))
    assert jnp.allclose(embeds, ref, atol=2e-2, rtol=2e-2), max_err


if __name__ == "__main__":
    key = jax.random.PRNGKey(0)
    k1, k2, k3 = jax.random.split(key, 3)

    # 1) Small, fully-aligned toy problem (single k-step, int8 mask path).
    _run_check(k1, n_user=16, n_item=16, n_tag=16, latdim=32)

    # 2) Non-multiple-of-8 sizes: exercises M/K/D padding (adj 280x280, D=48).
    _run_check(k2, n_user=150, n_item=130, n_tag=100, latdim=48)

    # 3) Direct kernel checks for the remaining code paths.
    params, adj, _ = _make_inputs(k3, 150, 130, 100, 48)
    emb = jnp.concatenate([params["uEmbeds"], params["iEmbeds"]], axis=0)
    ref = _gcn_ref(adj, emb, 0.5)

    # Multi-k accumulation, resident-emb (in-kernel pl.ds slicing) and
    # streamed-emb variants.
    prep_mk = prepare_adjacency(adj, force_tk=128)        # Kp=384 -> 3 k-steps
    out_res = gcn_leaky(prep_mk, emb, leaky=0.5)
    out_str = gcn_leaky(prep_mk, emb, leaky=0.5, force_stream_emb=True)
    jax.block_until_ready((out_res, out_str))
    assert jnp.allclose(out_res, ref, atol=1e-2, rtol=1e-2)
    assert jnp.allclose(out_str, ref, atol=1e-2, rtol=1e-2)

    # Weighted (non-row-uniform) adjacency -> bf16 fallback path.
    w_adj = adj * jax.random.uniform(k3, adj.shape, minval=0.5, maxval=1.5)
    prep_w = prepare_adjacency(w_adj)
    out_w = jax.block_until_ready(gcn_leaky(prep_w, emb, leaky=0.5))
    assert jnp.allclose(out_w, _gcn_ref(w_adj, emb, 0.5), atol=3e-2, rtol=3e-2)

    print("KERNEL_OK")
</pallas_src>

<mosaic_0001>
module attributes {stable_mosaic.version = 11 : i64} {
  func.func @_gcn_leaky_kernel(%arg0: i32, %arg1: i32, %arg2: memref<128x128xi8, #tpu.memory_space<vmem>>, %arg3: memref<128x128xbf16, #tpu.memory_space<vmem>>, %arg4: memref<128x1xf32, #tpu.memory_space<vmem>>, %arg5: memref<128x128xf32, #tpu.memory_space<vmem>>) attributes {dimension_semantics = [#tpu.dimension_semantics<parallel>, #tpu.dimension_semantics<arbitrary>], iteration_bounds = array<i64: 1, 1>, scalar_prefetch = 0 : i64, scratch_operands = 0 : i64, tpu.core_type = #tpu.core_type<tc>, window_params = [{transform_indices = @transform_0, window_bounds = array<i64: 128, 128>}, {pipeline_mode = #tpu.pipeline_mode<synchronous>, transform_indices = @transform_1, window_bounds = array<i64: 128, 128>}, {transform_indices = @transform_2, window_bounds = array<i64: 128, 1>}, {transform_indices = @transform_3, window_bounds = array<i64: 128, 128>}]} {
    %c0 = arith.constant 0 : index
    %c0_0 = arith.constant 0 : index
    %0 = vector.load %arg2[%c0, %c0_0] : memref<128x128xi8, #tpu.memory_space<vmem>>, vector<128x128xi8>
    %1 = arith.sitofp %0 : vector<128x128xi8> to vector<128x128xf32>
    %2 = arith.truncf %1 : vector<128x128xf32> to vector<128x128xbf16>
    %c0_1 = arith.constant 0 : index
    %c0_2 = arith.constant 0 : index
    %3 = vector.load %arg3[%c0_1, %c0_2] : memref<128x128xbf16, #tpu.memory_space<vmem>>, vector<128x128xbf16>
    %cst = arith.constant dense<0.000000e+00> : vector<128x128xf32>
    %4 = tpu.matmul %2, %3, %cst {dimension_numbers = #tpu.dot_dimension_numbers<[1], [0], [0], [1], [0, 0, 1, 1], [], []>} : vector<128x128xbf16>, vector<128x128xbf16>, vector<128x128xf32> -> vector<128x128xf32>
    %c0_3 = arith.constant 0 : index
    %c0_4 = arith.constant 0 : index
    %5 = vector.load %arg4[%c0_3, %c0_4] : memref<128x1xf32, #tpu.memory_space<vmem>>, vector<128x1xf32>
    %6 = vector.broadcast %5 : vector<128x1xf32> to vector<128x128xf32>
    %7 = arith.mulf %4, %6 : vector<128x128xf32>
    %cst_5 = arith.constant 0.000000e+00 : f32
    %8 = vector.broadcast %cst_5 : f32 to vector<128x128xf32>
    %9 = arith.cmpf oge, %7, %8 : vector<128x128xf32>
    %cst_6 = arith.constant 5.000000e-01 : f32
    %10 = vector.broadcast %cst_6 : f32 to vector<128x128xf32>
    %11 = arith.mulf %10, %7 : vector<128x128xf32>
    %12 = arith.select %9, %7, %11 : vector<128x128xi1>, vector<128x128xf32>
    %c0_7 = arith.constant 0 : index
    %c0_8 = arith.constant 0 : index
    %13 = vector.load %arg5[%c0_7, %c0_8] : memref<128x128xf32, #tpu.memory_space<vmem>>, vector<128x128xf32>
    tpu.vector_store %arg5[%c0_7, %c0_8], %12 {strides = array<i32>} : memref<128x128xf32, #tpu.memory_space<vmem>>, vector<128x128xf32>,
    return
  }
  func.func @transform_0(%arg0: i32, %arg1: i32) -> (i32, i32) {
    %c0_i32 = arith.constant 0 : i32
    return %arg0, %arg1 : i32, i32
  }
  func.func @transform_1(%arg0: i32, %arg1: i32) -> (i32, i32) {
    %c0_i32 = arith.constant 0 : i32
    %c0_i32_0 = arith.constant 0 : i32
    %c0_i32_1 = arith.constant 0 : i32
    return %c0_i32, %c0_i32_0 : i32, i32
  }
  func.func @transform_2(%arg0: i32, %arg1: i32) -> (i32, i32) {
    %c0_i32 = arith.constant 0 : i32
    %c0_i32_0 = arith.constant 0 : i32
    return %arg0, %c0_i32 : i32, i32
  }
  func.func @transform_3(%arg0: i32, %arg1: i32) -> (i32, i32) {
    %c0_i32 = arith.constant 0 : i32
    %c0_i32_0 = arith.constant 0 : i32
    return %arg0, %c0_i32 : i32, i32
  }
}

</mosaic_0001>

<llo_original>
// kernel: tpu_custom_call.1
$region0: #{tpu_custom_call.1}
  #allocation0 [shape = 'u32[]', space=smem, size = 0x4, offset = 0x4, fixed_abs, tag = 'smem constant byte address 0x4 - core index']
  #allocation1 [shape = 'u32[144,128]{1,0:T(1,128)}', space=vmem, size = 0x12000, scoped, tag = 'internal scratch']
  %s0 = inlined_call_operand.vmem [shape: s8[128,128], index: 0, kind: input, shape index: {}]
  %s1 = inlined_call_operand.vmem [shape: bf16[128,128], index: 1, kind: input, shape index: {}]
  %s2 = inlined_call_operand.vmem [shape: f32[128,1], index: 2, kind: input, shape index: {}]
  %s3 = inlined_call_operand.hbm [shape: f32[128,128], index: 3, kind: output, shape index: {}]
  %s4 = sld [smem:[#allocation0]]
  $region22: #{tpu_custom_call.1} parent=0
    _
  %s6 = ssub.s32 1, %s4
  %s7 = scalar_select 0, %s6, %s4
  $region1: #{tpu_custom_call.1} parent=0
    #allocation2 [shape = 'u8[65536]{0}', space=vmem, size = 0x10000, scoped, tag = 'output window, operand 0, single buffered']
    #allocation3 [shape = 's32[1]{0}', space=sflag, size = 0x4, scoped, tag = 'scoped memory for tpu_custom_call.1']
    %8 = vsyncpa [#allocation3], 0
    // Predicated region
    $region2: #{tpu_custom_call.1} parent=1 // pred_check
      _
    $region3: #{tpu_custom_call.1} parent=1 // pred_check_branch
      %10 = sbr.rel (0) target = $region5
    $region4: #{tpu_custom_call.1} parent=1 // pred_region
      _
    $region5: #{tpu_custom_call.1} parent=1 // pred_fallthru
      _
    // Predicated region
    $region6: #{tpu_custom_call.1} parent=1 // pred_check
      _
    $region7: #{tpu_custom_call.1} parent=1 // pred_check_branch
      %12 = sbr.rel (0) target = $region9
    $region8: #{tpu_custom_call.1} parent=1 // pred_region
      _
    $region9: #{tpu_custom_call.1} parent=1 // pred_fallthru
      _
    // Predicated region
    $region10: #{tpu_custom_call.1} parent=1 // pred_check
      _
    $region11: #{tpu_custom_call.1} parent=1 // pred_check_branch
      %14 = sbr.rel (0) target = $region13
    $region12: #{tpu_custom_call.1} parent=1 // pred_region
      _
    $region13: #{tpu_custom_call.1} parent=1 // pred_fallthru
      _
    %v16 = vld [vmem:[%s0] sm:$0xff]
    %v17 = vld [vmem:[%s0 + $0x8] sm:$0xff]
    %v18 = vld [vmem:[%s0 + $0x10] sm:$0xff]
    %v19 = vld [vmem:[%s0 + $0x18] sm:$0xff]
    %v20 = vunpack.c.l.s8.bf16 %v16
    %v21 = vunpack.c.h.s8.bf16 %v16
    %v22 = vunpack.c.l.s8.bf16 %v17
    %v23 = vunpack.c.h.s8.bf16 %v17
    %v24 = vunpack.c.l.s8.bf16 %v18
    %v25 = vunpack.c.h.s8.bf16 %v18
    %v26 = vunpack.c.l.s8.bf16 %v19
    %v27 = vunpack.c.h.s8.bf16 %v19
    %v28 = vld [vmem:[%s1] sm:$0xf]
    %v29 = vld [vmem:[%s1 + $0x4] sm:$0xf]
    %v30 = vld [vmem:[%s1 + $0x8] sm:$0xf]
    %v31 = vld [vmem:[%s1 + $0xc] sm:$0xf]
    %v32 = vld [vmem:[%s1 + $0x10] sm:$0xf]
    %v33 = vld [vmem:[%s1 + $0x14] sm:$0xf]
    %v34 = vld [vmem:[%s1 + $0x18] sm:$0xf]
    %v35 = vld [vmem:[%s1 + $0x1c] sm:$0xf]
    %v36 = vld [vmem:[%s1 + $0x20] sm:$0xf]
    %v37 = vld [vmem:[%s1 + $0x24] sm:$0xf]
    %v38 = vld [vmem:[%s1 + $0x28] sm:$0xf]
    %v39 = vld [vmem:[%s1 + $0x2c] sm:$0xf]
    %v40 = vld [vmem:[%s1 + $0x30] sm:$0xf]
    %v41 = vld [vmem:[%s1 + $0x34] sm:$0xf]
    %v42 = vld [vmem:[%s1 + $0x38] sm:$0xf]
    %v43 = vld [vmem:[%s1 + $0x3c] sm:$0xf]
    %v60 = vunpack.c.l.b16 %v28
    %v61 = vunpack.c.l.b16 %v29
    %v62 = vunpack.c.l.b16 %v30
    %v63 = vunpack.c.l.b16 %v31
    %v64 = vunpack.c.l.b16 %v32
    %v65 = vunpack.c.l.b16 %v33
    %v66 = vunpack.c.l.b16 %v34
    %v67 = vunpack.c.l.b16 %v35
    %v68 = vunpack.c.l.b16 %v36
    %v69 = vunpack.c.l.b16 %v37
    %v70 = vunpack.c.l.b16 %v38
    %v71 = vunpack.c.l.b16 %v39
    %v72 = vunpack.c.l.b16 %v40
    %v73 = vunpack.c.l.b16 %v41
    %v74 = vunpack.c.l.b16 %v42
    %v75 = vunpack.c.l.b16 %v43
    %v76 = vpack.c.b16 %v61, %v60
    %v77 = vpack.c.b16 %v63, %v62
    %v78 = vpack.c.b16 %v65, %v64
    %v79 = vpack.c.b16 %v67, %v66
    %v80 = vpack.c.b16 %v69, %v68
    %v81 = vpack.c.b16 %v71, %v70
    %v82 = vpack.c.b16 %v73, %v72
    %v83 = vpack.c.b16 %v75, %v74
    %92 = vmatprep.subr.bf16.mxu0 0
    %93 = vmatpush1.bf16.msra.mxu0 %v83
    %94 = vmatprep.subr.bf16.mxu0 0
    %95 = vmatpush1.bf16.msra.mxu0 %v82
    %96 = vmatprep.subr.bf16.mxu0 0
    %97 = vmatpush1.bf16.msra.mxu0 %v81
    %98 = vmatprep.subr.bf16.mxu0 0
    %99 = vmatpush1.bf16.msra.mxu0 %v80
    %100 = vmatprep.subr.bf16.mxu0 0
    %101 = vmatpush1.bf16.msra.mxu0 %v79
    %102 = vmatprep.subr.bf16.mxu0 0
    %103 = vmatpush1.bf16.msra.mxu0 %v78
    %104 = vmatprep.subr.bf16.mxu0 0
    %105 = vmatpush1.bf16.msra.mxu0 %v77
    %106 = vmatprep.subr.bf16.mxu0 0
    %107 = vmatpush1.bf16.msra.mxu0 %v76
    %108 = vmatprep.subr.bf16.mxu0 0
    %109 = vmatpush2.bf16.msra.mxu0 0
    %110 = vmatprep.subr.bf16.mxu0 0
    %111 = vmatpush2.bf16.msra.mxu0 0
    %112 = vmatprep.subr.bf16.mxu0 0
    %113 = vmatpush2.bf16.msra.mxu0 0
    %114 = vmatprep.subr.bf16.mxu0 0
    %115 = vmatpush2.bf16.msra.mxu0 0
    %116 = vmatprep.subr.bf16.mxu0 0
    %117 = vmatpush2.bf16.msra.mxu0 0
    %118 = vmatprep.subr.bf16.mxu0 0
    %119 = vmatpush2.bf16.msra.mxu0 0
    %120 = vmatprep.subr.bf16.mxu0 0
    %121 = vmatpush2.bf16.msra.mxu0 0
    %122 = vmatprep.subr.bf16.mxu0 0
    %123 = vmatpush2.bf16.msra.mxu0 0
    %124 = vmatprep.mubr.bf16.mxu0 0
    %125 = vmatmul.mubr.bf16.gmra.mxu0 %v20
    %v126 = vpop.f32.mrf.mxu0
    %v127 = vadd.f32 0.0, %v126
    %v128 = vpop.f32.mrf.mxu0
    %v129 = vpop.f32.mrf.mxu0
    %v130 = vadd.f32 0.0, %v129
    %v131 = vpop.f32.mrf.mxu0
    %132 = vmatprep.mubr.bf16.mxu0 0
    %133 = vmatmul.mubr.bf16.gmra.mxu0 %v21
    %v134 = vpop.f32.mrf.mxu0
    %v135 = vadd.f32 0.0, %v134
    %v136 = vpop.f32.mrf.mxu0
    %v137 = vpop.f32.mrf.mxu0
    %v138 = vadd.f32 0.0, %v137
    %v139 = vpop.f32.mrf.mxu0
    %140 = vmatprep.mubr.bf16.mxu0 0
    %141 = vmatmul.mubr.bf16.gmra.mxu0 %v22
    %v142 = vpop.f32.mrf.mxu0
    %v143 = vadd.f32 0.0, %v142
    %v144 = vpop.f32.mrf.mxu0
    %v145 = vpop.f32.mrf.mxu0
    %v146 = vadd.f32 0.0, %v145
    %v147 = vpop.f32.mrf.mxu0
    %148 = vmatprep.mubr.bf16.mxu0 0
    %149 = vmatmul.mubr.bf16.gmra.mxu0 %v23
    %v150 = vpop.f32.mrf.mxu0
    %v151 = vadd.f32 0.0, %v150
    %v152 = vpop.f32.mrf.mxu0
    %v153 = vpop.f32.mrf.mxu0
    %v154 = vadd.f32 0.0, %v153
    %v155 = vpop.f32.mrf.mxu0
    %156 = vmatprep.mubr.bf16.mxu0 0
    %157 = vmatmul.mubr.bf16.gmra.mxu0 %v24
    %v158 = vpop.f32.mrf.mxu0
    %v159 = vadd.f32 0.0, %v158
    %v160 = vpop.f32.mrf.mxu0
    %v161 = vpop.f32.mrf.mxu0
    %v162 = vadd.f32 0.0, %v161
    %v163 = vpop.f32.mrf.mxu0
    %164 = vmatprep.mubr.bf16.mxu0 0
    %165 = vmatmul.mubr.bf16.gmra.mxu0 %v25
    %v166 = vpop.f32.mrf.mxu0
    %v167 = vadd.f32 0.0, %v166
    %v168 = vpop.f32.mrf.mxu0
    %v169 = vpop.f32.mrf.mxu0
    %v170 = vadd.f32 0.0, %v169
    %v171 = vpop.f32.mrf.mxu0
    %172 = vmatprep.mubr.bf16.mxu0 0
    %173 = vmatmul.mubr.bf16.gmra.mxu0 %v26
    %v174 = vpop.f32.mrf.mxu0
    %v175 = vadd.f32 0.0, %v174
    %v176 = vpop.f32.mrf.mxu0
    %v177 = vpop.f32.mrf.mxu0
    %v178 = vadd.f32 0.0, %v177
    %v179 = vpop.f32.mrf.mxu0
    %180 = vmatprep.mubr.bf16.mxu0 0
    %181 = vmatmul.mubr.bf16.gmra.mxu0 %v27
    %v182 = vpop.f32.mrf.mxu0
    %v183 = vadd.f32 0.0, %v182
    %v184 = vpop.f32.mrf.mxu0
    %v185 = vpop.f32.mrf.mxu0
    %v186 = vadd.f32 0.0, %v185
    %v187 = vpop.f32.mrf.mxu0
    %188 = vdwg.mxu0
    %v189 = vld [vmem:[%s2] sm:$0xff]
    %v190 = vld [vmem:[%s2 + $0x8] sm:$0xff]
    %v191 = vld [vmem:[%s2 + $0x10] sm:$0xff]
    %v192 = vld [vmem:[%s2 + $0x18] sm:$0xff]
    %v193 = vld [vmem:[%s2 + $0x20] sm:$0xff]
    %v194 = vld [vmem:[%s2 + $0x28] sm:$0xff]
    %v195 = vld [vmem:[%s2 + $0x30] sm:$0xff]
    %v196 = vld [vmem:[%s2 + $0x38] sm:$0xff]
    %v197 = vld [vmem:[%s2 + $0x40] sm:$0xff]
    %v198 = vld [vmem:[%s2 + $0x48] sm:$0xff]
    %v199 = vld [vmem:[%s2 + $0x50] sm:$0xff]
    %v200 = vld [vmem:[%s2 + $0x58] sm:$0xff]
    %v201 = vld [vmem:[%s2 + $0x60] sm:$0xff]
    %v202 = vld [vmem:[%s2 + $0x68] sm:$0xff]
    %v203 = vld [vmem:[%s2 + $0x70] sm:$0xff]
    %v204 = vld [vmem:[%s2 + $0x78] sm:$0xff]
    %206 = vset.pattern.permute.xlu0 0
    %207 = vperm.xlu0 %206, %v189
    %v208 = vpop.permute.xlu0 %207
    %211 = vset.pattern.permute.xlu0 0
    %212 = vperm.xlu0 %211, %v190
    %v213 = vpop.permute.xlu0 %212
    %216 = vset.pattern.permute.xlu0 0
    %217 = vperm.xlu0 %216, %v191
    %v218 = vpop.permute.xlu0 %217
    %221 = vset.pattern.permute.xlu0 0
    %222 = vperm.xlu0 %221, %v192
    %v223 = vpop.permute.xlu0 %222
    %226 = vset.pattern.permute.xlu0 0
    %227 = vperm.xlu0 %226, %v193
    %v228 = vpop.permute.xlu0 %227
    %231 = vset.pattern.permute.xlu0 0
    %232 = vperm.xlu0 %231, %v194
    %v233 = vpop.permute.xlu0 %232
    %236 = vset.pattern.permute.xlu0 0
    %237 = vperm.xlu0 %236, %v195
    %v238 = vpop.permute.xlu0 %237
    %241 = vset.pattern.permute.xlu0 0
    %242 = vperm.xlu0 %241, %v196
    %v243 = vpop.permute.xlu0 %242
    %246 = vset.pattern.permute.xlu0 0
    %247 = vperm.xlu0 %246, %v197
    %v248 = vpop.permute.xlu0 %247
    %251 = vset.pattern.permute.xlu0 0
    %252 = vperm.xlu0 %251, %v198
    %v253 = vpop.permute.xlu0 %252
    %256 = vset.pattern.permute.xlu0 0
    %257 = vperm.xlu0 %256, %v199
    %v258 = vpop.permute.xlu0 %257
    %261 = vset.pattern.permute.xlu0 0
    %262 = vperm.xlu0 %261, %v200
    %v263 = vpop.permute.xlu0 %262
    %266 = vset.pattern.permute.xlu0 0
    %267 = vperm.xlu0 %266, %v201
    %v268 = vpop.permute.xlu0 %267
    %271 = vset.pattern.permute.xlu0 0
    %272 = vperm.xlu0 %271, %v202
    %v273 = vpop.permute.xlu0 %272
    %276 = vset.pattern.permute.xlu0 0
    %277 = vperm.xlu0 %276, %v203
    %v278 = vpop.permute.xlu0 %277
    %281 = vset.pattern.permute.xlu0 0
    %282 = vperm.xlu0 %281, %v204
    %v283 = vpop.permute.xlu0 %282
    %v285 = vmul.f32 %v127, %v208
    %v286 = vmul.f32 %v130, %v213
    %v287 = vmul.f32 %v135, %v218
    %v288 = vmul.f32 %v138, %v223
    %v289 = vmul.f32 %v143, %v228
    %v290 = vmul.f32 %v146, %v233
    %v291 = vmul.f32 %v151, %v238
    %v292 = vmul.f32 %v154, %v243
    %v293 = vmul.f32 %v159, %v248
    %v294 = vmul.f32 %v162, %v253
    %v295 = vmul.f32 %v167, %v258
    %v296 = vmul.f32 %v170, %v263
    %v297 = vmul.f32 %v175, %v268
    %v298 = vmul.f32 %v178, %v273
    %v299 = vmul.f32 %v183, %v278
    %v300 = vmul.f32 %v186, %v283
    %vm301 = vcmp.ge.f32.partialorder %v285, 0.0
    %vm302 = vcmp.ge.f32.partialorder %v286, 0.0
    %vm303 = vcmp.ge.f32.partialorder %v287, 0.0
    %vm304 = vcmp.ge.f32.partialorder %v288, 0.0
    %vm305 = vcmp.ge.f32.partialorder %v289, 0.0
    %vm306 = vcmp.ge.f32.partialorder %v290, 0.0
    %vm307 = vcmp.ge.f32.partialorder %v291, 0.0
    %vm308 = vcmp.ge.f32.partialorder %v292, 0.0
    %vm309 = vcmp.ge.f32.partialorder %v293, 0.0
    %vm310 = vcmp.ge.f32.partialorder %v294, 0.0
    %vm311 = vcmp.ge.f32.partialorder %v295, 0.0
    %vm312 = vcmp.ge.f32.partialorder %v296, 0.0
    %vm313 = vcmp.ge.f32.partialorder %v297, 0.0
    %vm314 = vcmp.ge.f32.partialorder %v298, 0.0
    %vm315 = vcmp.ge.f32.partialorder %v299, 0.0
    %vm316 = vcmp.ge.f32.partialorder %v300, 0.0
    %v317 = vmul.f32 %v285, 0.5
    %v318 = vmul.f32 %v286, 0.5
    %v319 = vmul.f32 %v287, 0.5
    %v320 = vmul.f32 %v288, 0.5
    %v321 = vmul.f32 %v289, 0.5
    %v322 = vmul.f32 %v290, 0.5
    %v323 = vmul.f32 %v291, 0.5
    %v324 = vmul.f32 %v292, 0.5
    %v325 = vmul.f32 %v293, 0.5
    %v326 = vmul.f32 %v294, 0.5
    %v327 = vmul.f32 %v295, 0.5
    %v328 = vmul.f32 %v296, 0.5
    %v329 = vmul.f32 %v297, 0.5
    %v330 = vmul.f32 %v298, 0.5
    %v331 = vmul.f32 %v299, 0.5
    %v332 = vmul.f32 %v300, 0.5
    %v333 = vsel %vm301, %v285, %v317
    %v334 = vsel %vm302, %v286, %v318
    %v335 = vsel %vm303, %v287, %v319
    %v336 = vsel %vm304, %v288, %v320
    %v337 = vsel %vm305, %v289, %v321
    %v338 = vsel %vm306, %v290, %v322
    %v339 = vsel %vm307, %v291, %v323
    %v340 = vsel %vm308, %v292, %v324
    %v341 = vsel %vm309, %v293, %v325
    %v342 = vsel %vm310, %v294, %v326
    %v343 = vsel %vm311, %v295, %v327
    %v344 = vsel %vm312, %v296, %v328
    %v345 = vsel %vm313, %v297, %v329
    %v346 = vsel %vm314, %v298, %v330
    %v347 = vsel %vm315, %v299, %v331
    %v348 = vsel %vm316, %v300, %v332
    %349 = vst [vmem:[#allocation2] sm:$0xff] %v333
    %350 = vst [vmem:[#allocation2 + $0x8] sm:$0xff] %v334
    %351 = vst [vmem:[#allocation2 + $0x10] sm:$0xff] %v335
    %352 = vst [vmem:[#allocation2 + $0x18] sm:$0xff] %v336
    %353 = vst [vmem:[#allocation2 + $0x20] sm:$0xff] %v337
    %354 = vst [vmem:[#allocation2 + $0x28] sm:$0xff] %v338
    %355 = vst [vmem:[#allocation2 + $0x30] sm:$0xff] %v339
    %356 = vst [vmem:[#allocation2 + $0x38] sm:$0xff] %v340
    %357 = vst [vmem:[#allocation2 + $0x40] sm:$0xff] %v341
    %358 = vst [vmem:[#allocation2 + $0x48] sm:$0xff] %v342
    %359 = vst [vmem:[#allocation2 + $0x50] sm:$0xff] %v343
    %360 = vst [vmem:[#allocation2 + $0x58] sm:$0xff] %v344
    %361 = vst [vmem:[#allocation2 + $0x60] sm:$0xff] %v345
    %362 = vst [vmem:[#allocation2 + $0x68] sm:$0xff] %v346
    %363 = vst [vmem:[#allocation2 + $0x70] sm:$0xff] %v347
    %364 = vst [vmem:[#allocation2 + $0x78] sm:$0xff] %v348
    // Predicated region
    $region14: #{tpu_custom_call.1} parent=1 // pred_check
      _
    $region15: #{tpu_custom_call.1} parent=1 // pred_check_branch
      %366 = sbr.rel (0) target = $region17
    $region16: #{tpu_custom_call.1} parent=1 // pred_region
      %s368 = ssub.s32 2048, 2048
      %369 = vsyncadd [#allocation3], %s368
      %s370 = sshll.u32 [#allocation2], 4
      %s371 = int_to_ptr.vmem [resolvable:$true] %s370
      %376 = dma.vmem_to_hbm [thread:$0]  %s371, 2048, %s3, [#allocation3], 128, 128, 8
    $region17: #{tpu_custom_call.1} parent=1 // pred_fallthru
      _
    // Predicated region
    $region18: #{tpu_custom_call.1} parent=1 // pred_check
      _
    $region19: #{tpu_custom_call.1} parent=1 // pred_check_branch
      %378 = sbr.rel (0) target = $region21
    $region20: #{tpu_custom_call.1} parent=1 // pred_region
      %379 = dma.done [#allocation3], 2048
    $region21: #{tpu_custom_call.1} parent=1 // pred_fallthru
      _
    %380 = vsyncpa [#allocation3], 1

</llo_original>
